<compile_context>
chip_gen: v6e
topology: v6e:2x2x1
jax: 0.10.0
libtpu: 0.0.40
codegen_flags: <defaults>
</compile_context>

<pallas_src>
import jax
import jax.numpy as jnp
from jax.experimental import pallas as pl
from jax.experimental.pallas import tpu as pltpu

LANE = 128
SUBLANE = 8


def _round_up(x, m):
    return (x + m - 1) // m * m


def _actor_kernel(ma_ref, x_ref, w1_ref, b1_ref, w2_ref, b2_ref,
                  w3_ref, b3_ref, o_ref):
    """One (TB, K) batch tile -> one (TB, A_pad) lane-dense bf16 output tile."""
    max_action = ma_ref[0]             # scalar-prefetched f32 in SMEM
    cdt = w1_ref.dtype                 # MXU operand dtype (bf16)

    # Layer 1: Linear + ReLU  (MXU matmul, f32 accumulation; elementwise f32)
    h = jnp.dot(x_ref[...].astype(cdt), w1_ref[...],
                preferred_element_type=jnp.float32)
    h = jnp.maximum(h + b1_ref[...], 0.0)

    # Layer 2: Linear + ReLU
    h = jnp.dot(h.astype(cdt), w2_ref[...],
                preferred_element_type=jnp.float32)
    h = jnp.maximum(h + b2_ref[...], 0.0)

    # Layer 3: Linear + tanh (EUP), scaled by max_action; lane-dense bf16 store
    h = jnp.dot(h.astype(cdt), w3_ref[...],
                preferred_element_type=jnp.float32)
    o_ref[...] = (max_action * jnp.tanh(h + b3_ref[...])).astype(o_ref.dtype)


def _batch_tiling(B, batch_tile, min_rows_for_split):
    """Pick a batch tile from B: bounded per-tile size, tiny padded tail,
    and >= 2 tiles for mid/large batches (megacore split on v7x)."""
    n_tiles = pl.cdiv(B, batch_tile)
    if B >= min_rows_for_split:
        n_tiles = max(n_tiles, 2)
    tb = _round_up(pl.cdiv(B, n_tiles), SUBLANE)
    b_pad = _round_up(B, tb)
    return tb, b_pad


def actor_forward(x, params, max_action, *, batch_tile=2048,
                  min_rows_for_split=512):
    """x: (B, state_dim*window_in) float32.  params from init_actor_params."""
    w1, b1 = params["w1"], params["b1"]
    w2, b2 = params["w2"], params["b2"]
    w3, b3 = params["w3"], params["b3"]
    action_dim = params["action_dim"]

    B, K = x.shape
    a_pad = w3.shape[1]

    tb, b_pad = _batch_tiling(B, batch_tile, min_rows_for_split)
    if b_pad != B:
        x = jnp.pad(x, ((0, b_pad - B), (0, 0)))   # ragged tail -> zero rows

    ma = jnp.full((1,), max_action, jnp.float32)    # scalar prefetch (SMEM)
    grid = (b_pad // tb,)

    def resident(shape):
        # weights/biases: same block every grid step -> stay VMEM-resident
        return pl.BlockSpec(shape, lambda i, ma_ref: (0, 0))

    out = pl.pallas_call(
        _actor_kernel,
        out_shape=jax.ShapeDtypeStruct((b_pad, a_pad), jnp.bfloat16),
        grid_spec=pltpu.PrefetchScalarGridSpec(
            num_scalar_prefetch=1,                  # max_action -> SMEM
            grid=grid,
            in_specs=[
                pl.BlockSpec((tb, K), lambda i, ma_ref: (i, 0)),   # x tile
                resident(w1.shape), resident(b1.shape),
                resident(w2.shape), resident(b2.shape),
                resident(w3.shape), resident(b3.shape),
            ],
            out_specs=pl.BlockSpec((tb, a_pad), lambda i, ma_ref: (i, 0)),
        ),
        compiler_params=pltpu.CompilerParams(
            dimension_semantics=("parallel",),      # both TCs on v7x
            vmem_limit_bytes=32 * 1024 * 1024,      # safe within v7x 64 MiB
        ),
    )(ma, x, w1, b1, w2, b2, w3, b3)

    # Free layout plumbing: drop padded batch rows / padded action lanes,
    # return f32 actions to the caller.
    return out[:B, :action_dim].astype(jnp.float32)


def init_actor_params(key, state_dim, action_dim, h_size, window_in=1,
                      compute_dtype=jnp.bfloat16):
    """nn.Linear-style U(-1/sqrt(fan_in), 1/sqrt(fan_in)) init.

    Returns (params, ref_params):
      params     : lane-padded, weights stored transposed (in, out) in
                   `compute_dtype` for the MXU; biases (1, padded_out) f32.
      ref_params : unpadded float32 copies for the pure-JAX reference.
    """
    in_dim = state_dim * window_in
    h_pad = _round_up(h_size, LANE)
    a_pad = _round_up(action_dim, LANE)

    layer_dims = [
        (in_dim, h_size, in_dim, h_pad),
        (h_size, h_size, h_pad, h_pad),
        (h_size, action_dim, h_pad, a_pad),
    ]
    params = {"action_dim": action_dim}
    ref_params = {}
    for i, (fan_in, fan_out, pad_in, pad_out) in enumerate(layer_dims, start=1):
        key, kw, kb = jax.random.split(key, 3)
        bound = 1.0 / float(fan_in) ** 0.5
        w = jax.random.uniform(kw, (fan_in, fan_out), jnp.float32, -bound, bound)
        b = jax.random.uniform(kb, (fan_out,), jnp.float32, -bound, bound)
        ref_params[f"w{i}"] = w
        ref_params[f"b{i}"] = b
        # Zero-pad to lane-dense shapes; padded rows/cols are exact zeros so
        # the forward math is unchanged in the real lanes.
        w_p = jnp.zeros((pad_in, pad_out), jnp.float32).at[:fan_in, :fan_out].set(w)
        b_p = jnp.zeros((1, pad_out), jnp.float32).at[0, :fan_out].set(b)
        params[f"w{i}"] = w_p.astype(compute_dtype)
        params[f"b{i}"] = b_p                      # biases stay f32
    return params, ref_params


def actor_reference_f32(x, ref_params, max_action):
    """Pure f32 reference matching the PyTorch module exactly."""
    h1 = jnp.maximum(x @ ref_params["w1"] + ref_params["b1"], 0.0)
    h2 = jnp.maximum(h1 @ ref_params["w2"] + ref_params["b2"], 0.0)
    return max_action * jnp.tanh(h2 @ ref_params["w3"] + ref_params["b3"])


def actor_reference_matched(x, params, max_action):
    """Reference with the same bf16-operand / f32-accumulate / bf16-store
    numerics as the kernel."""
    cdt = params["w1"].dtype
    h = jnp.dot(x.astype(cdt), params["w1"],
                preferred_element_type=jnp.float32) + params["b1"]
    h = jnp.maximum(h, 0.0)
    h = jnp.dot(h.astype(cdt), params["w2"],
                preferred_element_type=jnp.float32) + params["b2"]
    h = jnp.maximum(h, 0.0)
    h = jnp.dot(h.astype(cdt), params["w3"],
                preferred_element_type=jnp.float32) + params["b3"]
    out = (max_action * jnp.tanh(h)).astype(jnp.bfloat16).astype(jnp.float32)
    return out[:, :params["action_dim"]]


if __name__ == "__main__":
    # Small shapes consistent with the module's forward.
    batch = 8
    state_dim = 20
    window_in = 1
    h_size = 32
    action_dim = 2
    max_action = 2.0

    key = jax.random.PRNGKey(0)
    key, kx = jax.random.split(key)
    x = jax.random.normal(kx, (batch, state_dim * window_in), jnp.float32)

    params, ref_params = init_actor_params(key, state_dim, action_dim,
                                           h_size, window_in)

    out = jax.block_until_ready(actor_forward(x, params, max_action))
    assert out.shape == (batch, action_dim)

    # Tight check vs a reference using identical bf16-operand/bf16-out numerics.
    matched = actor_reference_matched(x, params, max_action)
    assert jnp.allclose(out, matched, atol=2e-3, rtol=2e-3)

    # Sanity check vs the exact f32 PyTorch-equivalent forward (bf16 MXU
    # operands + bf16 output store -> small, bounded deviation).
    ref = actor_reference_f32(x, ref_params, max_action)
    assert jnp.allclose(out, ref, atol=5e-2, rtol=5e-2)

    # Ragged / multi-tile path: B=600 -> 2 tiles of 304 rows (8 padded rows
    # total, grid split across both TCs on v7x), same numerics.
    key, kx2 = jax.random.split(key)
    x_big = jax.random.normal(kx2, (600, state_dim * window_in), jnp.float32)
    out_big = jax.block_until_ready(actor_forward(x_big, params, max_action))
    assert out_big.shape == (600, action_dim)
    matched_big = actor_reference_matched(x_big, params, max_action)
    assert jnp.allclose(out_big, matched_big, atol=2e-3, rtol=2e-3)

    print("KERNEL_OK")
</pallas_src>

<mosaic_0001>
module attributes {stable_mosaic.version = 11 : i64} {
  func.func @_actor_kernel(%arg0: i32, %arg1: memref<1xf32, #tpu.memory_space<smem>>, %arg2: memref<8x20xf32, #tpu.memory_space<vmem>>, %arg3: memref<20x128xbf16, #tpu.memory_space<vmem>>, %arg4: memref<1x128xf32, #tpu.memory_space<vmem>>, %arg5: memref<128x128xbf16, #tpu.memory_space<vmem>>, %arg6: memref<1x128xf32, #tpu.memory_space<vmem>>, %arg7: memref<128x128xbf16, #tpu.memory_space<vmem>>, %arg8: memref<1x128xf32, #tpu.memory_space<vmem>>, %arg9: memref<8x128xbf16, #tpu.memory_space<vmem>>) attributes {dimension_semantics = [#tpu.dimension_semantics<parallel>], iteration_bounds = array<i64: 1>, scalar_prefetch = 1 : i64, scratch_operands = 0 : i64, tpu.core_type = #tpu.core_type<tc>, window_params = [{transform_indices = @transform_0, window_bounds = array<i64: 8, 20>}, {pipeline_mode = #tpu.pipeline_mode<synchronous>, transform_indices = @transform_1, window_bounds = array<i64: 20, 128>}, {pipeline_mode = #tpu.pipeline_mode<synchronous>, transform_indices = @transform_2, window_bounds = array<i64: 1, 128>}, {pipeline_mode = #tpu.pipeline_mode<synchronous>, transform_indices = @transform_3, window_bounds = array<i64: 128, 128>}, {pipeline_mode = #tpu.pipeline_mode<synchronous>, transform_indices = @transform_4, window_bounds = array<i64: 1, 128>}, {pipeline_mode = #tpu.pipeline_mode<synchronous>, transform_indices = @transform_5, window_bounds = array<i64: 128, 128>}, {pipeline_mode = #tpu.pipeline_mode<synchronous>, transform_indices = @transform_6, window_bounds = array<i64: 1, 128>}, {transform_indices = @transform_7, window_bounds = array<i64: 8, 128>}]} {
    %c0 = arith.constant 0 : index
    %0 = memref.load %arg1[%c0] : memref<1xf32, #tpu.memory_space<smem>>
    %c0_0 = arith.constant 0 : index
    %c0_1 = arith.constant 0 : index
    %1 = vector.load %arg2[%c0_0, %c0_1] : memref<8x20xf32, #tpu.memory_space<vmem>>, vector<8x20xf32>
    %2 = arith.truncf %1 : vector<8x20xf32> to vector<8x20xbf16>
    %c0_2 = arith.constant 0 : index
    %c0_3 = arith.constant 0 : index
    %3 = vector.load %arg3[%c0_2, %c0_3] : memref<20x128xbf16, #tpu.memory_space<vmem>>, vector<20x128xbf16>
    %cst = arith.constant dense<0.000000e+00> : vector<8x128xf32>
    %4 = tpu.matmul %2, %3, %cst {dimension_numbers = #tpu.dot_dimension_numbers<[1], [0], [0], [1], [0, 0, 1, 1], [], []>} : vector<8x20xbf16>, vector<20x128xbf16>, vector<8x128xf32> -> vector<8x128xf32>
    %c0_4 = arith.constant 0 : index
    %c0_5 = arith.constant 0 : index
    %5 = vector.load %arg4[%c0_4, %c0_5] : memref<1x128xf32, #tpu.memory_space<vmem>>, vector<1x128xf32>
    %6 = vector.broadcast %5 : vector<1x128xf32> to vector<8x128xf32>
    %7 = arith.addf %4, %6 : vector<8x128xf32>
    %cst_6 = arith.constant 0.000000e+00 : f32
    %8 = vector.broadcast %cst_6 : f32 to vector<8x128xf32>
    %9 = arith.maximumf %7, %8 : vector<8x128xf32>
    %10 = arith.truncf %9 : vector<8x128xf32> to vector<8x128xbf16>
    %c0_7 = arith.constant 0 : index
    %c0_8 = arith.constant 0 : index
    %11 = vector.load %arg5[%c0_7, %c0_8] : memref<128x128xbf16, #tpu.memory_space<vmem>>, vector<128x128xbf16>
    %cst_9 = arith.constant dense<0.000000e+00> : vector<8x128xf32>
    %12 = tpu.matmul %10, %11, %cst_9 {dimension_numbers = #tpu.dot_dimension_numbers<[1], [0], [0], [1], [0, 0, 1, 1], [], []>} : vector<8x128xbf16>, vector<128x128xbf16>, vector<8x128xf32> -> vector<8x128xf32>
    %c0_10 = arith.constant 0 : index
    %c0_11 = arith.constant 0 : index
    %13 = vector.load %arg6[%c0_10, %c0_11] : memref<1x128xf32, #tpu.memory_space<vmem>>, vector<1x128xf32>
    %14 = vector.broadcast %13 : vector<1x128xf32> to vector<8x128xf32>
    %15 = arith.addf %12, %14 : vector<8x128xf32>
    %cst_12 = arith.constant 0.000000e+00 : f32
    %16 = vector.broadcast %cst_12 : f32 to vector<8x128xf32>
    %17 = arith.maximumf %15, %16 : vector<8x128xf32>
    %18 = arith.truncf %17 : vector<8x128xf32> to vector<8x128xbf16>
    %c0_13 = arith.constant 0 : index
    %c0_14 = arith.constant 0 : index
    %19 = vector.load %arg7[%c0_13, %c0_14] : memref<128x128xbf16, #tpu.memory_space<vmem>>, vector<128x128xbf16>
    %cst_15 = arith.constant dense<0.000000e+00> : vector<8x128xf32>
    %20 = tpu.matmul %18, %19, %cst_15 {dimension_numbers = #tpu.dot_dimension_numbers<[1], [0], [0], [1], [0, 0, 1, 1], [], []>} : vector<8x128xbf16>, vector<128x128xbf16>, vector<8x128xf32> -> vector<8x128xf32>
    %c0_16 = arith.constant 0 : index
    %c0_17 = arith.constant 0 : index
    %21 = vector.load %arg8[%c0_16, %c0_17] : memref<1x128xf32, #tpu.memory_space<vmem>>, vector<1x128xf32>
    %22 = vector.broadcast %21 : vector<1x128xf32> to vector<8x128xf32>
    %23 = arith.addf %20, %22 : vector<8x128xf32>
    %24 = math.tanh %23 : vector<8x128xf32>
    %25 = vector.broadcast %0 : f32 to vector<8x128xf32>
    %26 = arith.mulf %25, %24 : vector<8x128xf32>
    %27 = arith.truncf %26 : vector<8x128xf32> to vector<8x128xbf16>
    %c0_18 = arith.constant 0 : index
    %c0_19 = arith.constant 0 : index
    %28 = vector.load %arg9[%c0_18, %c0_19] : memref<8x128xbf16, #tpu.memory_space<vmem>>, vector<8x128xbf16>
    tpu.vector_store %arg9[%c0_18, %c0_19], %27 {strides = array<i32>} : memref<8x128xbf16, #tpu.memory_space<vmem>>, vector<8x128xbf16>,
    return
  }
  func.func @transform_0(%arg0: i32, %arg1: memref<1xf32, #tpu.memory_space<smem>>) -> (i32, i32) {
    %c0_i32 = arith.constant 0 : i32
    %c0_i32_0 = arith.constant 0 : i32
    return %arg0, %c0_i32 : i32, i32
  }
  func.func @transform_1(%arg0: i32, %arg1: memref<1xf32, #tpu.memory_space<smem>>) -> (i32, i32) {
    %c0_i32 = arith.constant 0 : i32
    %c0_i32_0 = arith.constant 0 : i32
    %c0_i32_1 = arith.constant 0 : i32
    return %c0_i32, %c0_i32_0 : i32, i32
  }
  func.func @transform_2(%arg0: i32, %arg1: memref<1xf32, #tpu.memory_space<smem>>) -> (i32, i32) {
    %c0_i32 = arith.constant 0 : i32
    %c0_i32_0 = arith.constant 0 : i32
    %c0_i32_1 = arith.constant 0 : i32
    return %c0_i32, %c0_i32_0 : i32, i32
  }
  func.func @transform_3(%arg0: i32, %arg1: memref<1xf32, #tpu.memory_space<smem>>) -> (i32, i32) {
    %c0_i32 = arith.constant 0 : i32
    %c0_i32_0 = arith.constant 0 : i32
    %c0_i32_1 = arith.constant 0 : i32
    return %c0_i32, %c0_i32_0 : i32, i32
  }
  func.func @transform_4(%arg0: i32, %arg1: memref<1xf32, #tpu.memory_space<smem>>) -> (i32, i32) {
    %c0_i32 = arith.constant 0 : i32
    %c0_i32_0 = arith.constant 0 : i32
    %c0_i32_1 = arith.constant 0 : i32
    return %c0_i32, %c0_i32_0 : i32, i32
  }
  func.func @transform_5(%arg0: i32, %arg1: memref<1xf32, #tpu.memory_space<smem>>) -> (i32, i32) {
    %c0_i32 = arith.constant 0 : i32
    %c0_i32_0 = arith.constant 0 : i32
    %c0_i32_1 = arith.constant 0 : i32
    return %c0_i32, %c0_i32_0 : i32, i32
  }
  func.func @transform_6(%arg0: i32, %arg1: memref<1xf32, #tpu.memory_space<smem>>) -> (i32, i32) {
    %c0_i32 = arith.constant 0 : i32
    %c0_i32_0 = arith.constant 0 : i32
    %c0_i32_1 = arith.constant 0 : i32
    return %c0_i32, %c0_i32_0 : i32, i32
  }
  func.func @transform_7(%arg0: i32, %arg1: memref<1xf32, #tpu.memory_space<smem>>) -> (i32, i32) {
    %c0_i32 = arith.constant 0 : i32
    %c0_i32_0 = arith.constant 0 : i32
    return %arg0, %c0_i32 : i32, i32
  }
}

</mosaic_0001>

<llo_original>
// kernel: tpu_custom_call.1
$region0: #{tpu_custom_call.1}
  #allocation0 [shape = 'u32[]', space=smem, size = 0x4, offset = 0x4, fixed_abs, tag = 'smem constant byte address 0x4 - core index']
  #allocation1 [shape = 'u32[144,128]{1,0:T(1,128)}', space=vmem, size = 0x12000, scoped, tag = 'internal scratch']
  #allocation2 [shape = 's32[1]{0}', space=sflag, size = 0x4, scoped, tag = 'scoped memory for tpu_custom_call.1']
  #allocation3 [shape = 'f32[1]{0:T(128)S(6)}', space=smem, size = 0x200, scoped, tag = 'prefetched SMEM operand 0']
  %s0 = inlined_call_operand.<no memory space> [shape: f32[1], index: 0, kind: input, shape index: {}]
  %s1 = inlined_call_operand.hbm [shape: f32[8,20], index: 1, kind: input, shape index: {}]
  %s2 = inlined_call_operand.hbm [shape: bf16[20,128], index: 2, kind: input, shape index: {}]
  %s3 = inlined_call_operand.vmem [shape: f32[1,128], index: 3, kind: input, shape index: {}]
  %s4 = inlined_call_operand.hbm [shape: bf16[128,128], index: 4, kind: input, shape index: {}]
  %s5 = inlined_call_operand.vmem [shape: f32[1,128], index: 5, kind: input, shape index: {}]
  %s6 = inlined_call_operand.hbm [shape: bf16[128,128], index: 6, kind: input, shape index: {}]
  %s7 = inlined_call_operand.vmem [shape: f32[1,128], index: 7, kind: input, shape index: {}]
  %s8 = inlined_call_operand.hbm [shape: bf16[8,128], index: 8, kind: output, shape index: {}]
  %s9 = sld [smem:[#allocation0]]
  $region54: #{tpu_custom_call.1} parent=0
    _
  %s11 = ssub.s32 1, %s9
  %s12 = scalar_select 0, %s11, %s9
  %13 = sst [smem:[#allocation3]] %s0
  $region1: #{tpu_custom_call.1} parent=0
    #allocation4 [shape = 'u8[4096]{0}', space=vmem, size = 0x1000, scoped, tag = 'input window, operand 1, single buffered']
    #allocation5 [shape = 's32[1]{0}', space=sflag, size = 0x4, scoped, tag = 'scoped memory for tpu_custom_call.1']
    #allocation6 [shape = 's32[1]{0}', space=sflag, size = 0x4, scoped, tag = 'scoped memory for tpu_custom_call.1']
    #allocation7 [shape = 'u8[6144]{0}', space=vmem, size = 0x1800, scoped, tag = 'input window, operand 2, single buffered']
    #allocation8 [shape = 's32[1]{0}', space=sflag, size = 0x4, scoped, tag = 'scoped memory for tpu_custom_call.1']
    #allocation9 [shape = 'u8[32768]{0}', space=vmem, size = 0x8000, scoped, tag = 'input window, operand 4, single buffered']
    #allocation10 [shape = 'u8[32768]{0}', space=vmem, size = 0x8000, scoped, tag = 'input window, operand 6, single buffered']
    #allocation11 [shape = 's32[1]{0}', space=sflag, size = 0x4, scoped, tag = 'scoped memory for tpu_custom_call.1']
    #allocation12 [shape = 'u8[2048]{0}', space=vmem, size = 0x800, scoped, tag = 'output window, operand 0, single buffered']
    %14 = vsyncpa [#allocation5], 0
    %15 = vsyncpa [#allocation8], 0
    %16 = vsyncpa [#allocation11], 0
    %17 = vsyncpa [#allocation6], 0
    // Predicated region
    $region2: #{tpu_custom_call.1} parent=1 // pred_check
      _
    $region3: #{tpu_custom_call.1} parent=1 // pred_check_branch
      %19 = sbr.rel (0) target = $region5
    $region4: #{tpu_custom_call.1} parent=1 // pred_region
      %s21 = ssub.s32 128, 128
      %22 = vsyncadd [#allocation5], %s21
      %s24 = sshll.u32 [#allocation4], 4
      %s25 = int_to_ptr.vmem [resolvable:$true] %s24
      %27 = dma.hbm_to_vmem [thread:$0]  %s1, 128, %s25, [#allocation5]
    $region5: #{tpu_custom_call.1} parent=1 // pred_fallthru
      _
    // Predicated region
    $region6: #{tpu_custom_call.1} parent=1 // pred_check
      _
    $region7: #{tpu_custom_call.1} parent=1 // pred_check_branch
      %29 = sbr.rel (0) target = $region9
    $region8: #{tpu_custom_call.1} parent=1 // pred_region
      %s31 = ssub.s32 192, 192
      %32 = vsyncadd [#allocation8], %s31
      %s33 = sshll.u32 [#allocation7], 4
      %s34 = int_to_ptr.vmem [resolvable:$true] %s33
      %39 = dma.hbm_to_vmem [thread:$0]  %s2, 192, %s34, [#allocation8], 64, 64, 4
    $region9: #{tpu_custom_call.1} parent=1 // pred_fallthru
      _
    // Predicated region
    $region10: #{tpu_custom_call.1} parent=1 // pred_check
      _
    $region11: #{tpu_custom_call.1} parent=1 // pred_check_branch
      %41 = sbr.rel (0) target = $region13
    $region12: #{tpu_custom_call.1} parent=1 // pred_region
      _
    $region13: #{tpu_custom_call.1} parent=1 // pred_fallthru
      _
    // Predicated region
    $region14: #{tpu_custom_call.1} parent=1 // pred_check
      _
    $region15: #{tpu_custom_call.1} parent=1 // pred_check_branch
      %43 = sbr.rel (0) target = $region17
    $region16: #{tpu_custom_call.1} parent=1 // pred_region
      %s45 = ssub.s32 1024, 1024
      %46 = vsyncadd [#allocation8], %s45
      %s47 = sshll.u32 [#allocation9], 4
      %s48 = int_to_ptr.vmem [resolvable:$true] %s47
      %53 = dma.hbm_to_vmem [thread:$0]  %s4, 1024, %s48, [#allocation8], 64, 64, 4
    $region17: #{tpu_custom_call.1} parent=1 // pred_fallthru
      _
    // Predicated region
    $region18: #{tpu_custom_call.1} parent=1 // pred_check
      _
    $region19: #{tpu_custom_call.1} parent=1 // pred_check_branch
      %55 = sbr.rel (0) target = $region21
    $region20: #{tpu_custom_call.1} parent=1 // pred_region
      _
    $region21: #{tpu_custom_call.1} parent=1 // pred_fallthru
      _
    // Predicated region
    $region22: #{tpu_custom_call.1} parent=1 // pred_check
      _
    $region23: #{tpu_custom_call.1} parent=1 // pred_check_branch
      %57 = sbr.rel (0) target = $region25
    $region24: #{tpu_custom_call.1} parent=1 // pred_region
      %s59 = ssub.s32 1024, 1024
      %60 = vsyncadd [#allocation11], %s59
      %s61 = sshll.u32 [#allocation10], 4
      %s62 = int_to_ptr.vmem [resolvable:$true] %s61
      %67 = dma.hbm_to_vmem [thread:$0]  %s6, 1024, %s62, [#allocation11], 64, 64, 4
    $region25: #{tpu_custom_call.1} parent=1 // pred_fallthru
      _
    // Predicated region
    $region26: #{tpu_custom_call.1} parent=1 // pred_check
      _
    $region27: #{tpu_custom_call.1} parent=1 // pred_check_branch
      %69 = sbr.rel (0) target = $region29
    $region28: #{tpu_custom_call.1} parent=1 // pred_region
      _
    $region29: #{tpu_custom_call.1} parent=1 // pred_fallthru
      _
    // Predicated region
    $region30: #{tpu_custom_call.1} parent=1 // pred_check
      _
    $region31: #{tpu_custom_call.1} parent=1 // pred_check_branch
      %71 = sbr.rel (0) target = $region33
    $region32: #{tpu_custom_call.1} parent=1 // pred_region
      %72 = dma.done [#allocation5], 128
    $region33: #{tpu_custom_call.1} parent=1 // pred_fallthru
      _
    // Predicated region
    $region34: #{tpu_custom_call.1} parent=1 // pred_check
      _
    $region35: #{tpu_custom_call.1} parent=1 // pred_check_branch
      %74 = sbr.rel (0) target = $region37
    $region36: #{tpu_custom_call.1} parent=1 // pred_region
      %75 = dma.done [#allocation8], 192
    $region37: #{tpu_custom_call.1} parent=1 // pred_fallthru
      _
    // Predicated region
    $region38: #{tpu_custom_call.1} parent=1 // pred_check
      _
    $region39: #{tpu_custom_call.1} parent=1 // pred_check_branch
      %77 = sbr.rel (0) target = $region41
    $region40: #{tpu_custom_call.1} parent=1 // pred_region
      %78 = dma.done [#allocation8], 1024
    $region41: #{tpu_custom_call.1} parent=1 // pred_fallthru
      _
    // Predicated region
    $region42: #{tpu_custom_call.1} parent=1 // pred_check
      _
    $region43: #{tpu_custom_call.1} parent=1 // pred_check_branch
      %80 = sbr.rel (0) target = $region45
    $region44: #{tpu_custom_call.1} parent=1 // pred_region
      %81 = dma.done [#allocation11], 1024
    $region45: #{tpu_custom_call.1} parent=1 // pred_fallthru
      _
    %s83 = sld [smem:[#allocation3]]
    %v84 = vld [vmem:[#allocation4] sm:$0xff]
    %v85 = vpack.c.bf16 %v84, %v84
    %v86 = vld [vmem:[#allocation7] sm:$0xf]
    %v87 = vld [vmem:[#allocation7 + $0x4] sm:$0xf]
    %v88 = vld [vmem:[#allocation7 + $0x8] sm:$0x3]
    %v89 = vld [vmem:[%s3] sm:$0x1]
    %v91 = vlaneseq
    %v92 = vshrl.u32 %v91, 7
    %v93 = vsub.s32 0, %v92
    %v94 = vrot.slane %v89, %v93
    %v99 = vunpack.c.l.b16 %v86
    %v100 = vunpack.c.l.b16 %v87
    %v101 = vunpack.c.l.b16 %v88
    %v102 = vpack.c.b16 %v100, %v99
    %v103 = vpack.c.b16 %v101, %v101
    %vm105 = vcmask 162816
    %v107 = vsel %vm105, %v85, 0
    %vm109 = vcmask 1041408
    %v111 = vsel %vm109, %v103, 0
    %113 = vmatprep.subr.bf16.mxu0 0
    %114 = vmatpush1.bf16.msra.mxu0 0
    %115 = vmatprep.subr.bf16.mxu0 0
    %116 = vmatpush1.bf16.msra.mxu0 0
    %117 = vmatprep.subr.bf16.mxu0 0
    %118 = vmatpush1.bf16.msra.mxu0 0
    %119 = vmatprep.subr.bf16.mxu0 0
    %120 = vmatpush1.bf16.msra.mxu0 0
    %121 = vmatprep.subr.bf16.mxu0 0
    %122 = vmatpush1.bf16.msra.mxu0 0
    %123 = vmatprep.subr.bf16.mxu0 0
    %124 = vmatpush1.bf16.msra.mxu0 0
    %125 = vmatprep.subr.bf16.mxu0 0
    %126 = vmatpush1.bf16.msra.mxu0 %v111
    %127 = vmatprep.subr.bf16.mxu0 0
    %128 = vmatpush1.bf16.msra.mxu0 %v102
    %129 = vmatprep.subr.bf16.mxu0 0
    %130 = vmatpush2.bf16.msra.mxu0 0
    %131 = vmatprep.subr.bf16.mxu0 0
    %132 = vmatpush2.bf16.msra.mxu0 0
    %133 = vmatprep.subr.bf16.mxu0 0
    %134 = vmatpush2.bf16.msra.mxu0 0
    %135 = vmatprep.subr.bf16.mxu0 0
    %136 = vmatpush2.bf16.msra.mxu0 0
    %137 = vmatprep.subr.bf16.mxu0 0
    %138 = vmatpush2.bf16.msra.mxu0 0
    %139 = vmatprep.subr.bf16.mxu0 0
    %140 = vmatpush2.bf16.msra.mxu0 0
    %141 = vmatprep.subr.bf16.mxu0 0
    %142 = vmatpush2.bf16.msra.mxu0 0
    %143 = vmatprep.subr.bf16.mxu0 0
    %144 = vmatpush2.bf16.msra.mxu0 0
    %145 = vmatprep.mubr.bf16.mxu0 0
    %146 = vmatmul.mubr.bf16.gmra.mxu0 %v107
    %v147 = vpop.f32.mrf.mxu0
    %v148 = vadd.f32 %v94, %v147
    %v149 = vpop.f32.mrf.mxu0
    %v150 = vpop.f32.mrf.mxu0
    %v151 = vpop.f32.mrf.mxu0
    %152 = vdwg.mxu0
    %v153 = vmax.f32 %v148, 0.0
    %v154 = vpack.c.bf16 %v153, %v153
    %v155 = vld [vmem:[#allocation9] sm:$0xf]
    %v156 = vld [vmem:[#allocation9 + $0x4] sm:$0xf]
    %v157 = vld [vmem:[#allocation9 + $0x8] sm:$0xf]
    %v158 = vld [vmem:[#allocation9 + $0xc] sm:$0xf]
    %v159 = vld [vmem:[#allocation9 + $0x10] sm:$0xf]
    %v160 = vld [vmem:[#allocation9 + $0x14] sm:$0xf]
    %v161 = vld [vmem:[#allocation9 + $0x18] sm:$0xf]
    %v162 = vld [vmem:[#allocation9 + $0x1c] sm:$0xf]
    %v163 = vld [vmem:[#allocation9 + $0x20] sm:$0xf]
    %v164 = vld [vmem:[#allocation9 + $0x24] sm:$0xf]
    %v165 = vld [vmem:[#allocation9 + $0x28] sm:$0xf]
    %v166 = vld [vmem:[#allocation9 + $0x2c] sm:$0xf]
    %v167 = vld [vmem:[#allocation9 + $0x30] sm:$0xf]
    %v168 = vld [vmem:[#allocation9 + $0x34] sm:$0xf]
    %v169 = vld [vmem:[#allocation9 + $0x38] sm:$0xf]
    %v170 = vld [vmem:[#allocation9 + $0x3c] sm:$0xf]
    %v171 = vld [vmem:[%s5] sm:$0x1]
    %v173 = vlaneseq
    %v174 = vshrl.u32 %v173, 7
    %v175 = vsub.s32 0, %v174
    %v176 = vrot.slane %v171, %v175
    %v194 = vunpack.c.l.b16 %v155
    %v195 = vunpack.c.l.b16 %v156
    %v196 = vunpack.c.l.b16 %v157
    %v197 = vunpack.c.l.b16 %v158
    %v198 = vunpack.c.l.b16 %v159
    %v199 = vunpack.c.l.b16 %v160
    %v200 = vunpack.c.l.b16 %v161
    %v201 = vunpack.c.l.b16 %v162
    %v202 = vunpack.c.l.b16 %v163
    %v203 = vunpack.c.l.b16 %v164
    %v204 = vunpack.c.l.b16 %v165
    %v205 = vunpack.c.l.b16 %v166
    %v206 = vunpack.c.l.b16 %v167
    %v207 = vunpack.c.l.b16 %v168
    %v208 = vunpack.c.l.b16 %v169
    %v209 = vunpack.c.l.b16 %v170
    %v210 = vpack.c.b16 %v195, %v194
    %v211 = vpack.c.b16 %v197, %v196
    %v212 = vpack.c.b16 %v199, %v198
    %v213 = vpack.c.b16 %v201, %v200
    %v214 = vpack.c.b16 %v203, %v202
    %v215 = vpack.c.b16 %v205, %v204
    %v216 = vpack.c.b16 %v207, %v206
    %v217 = vpack.c.b16 %v209, %v208
    %226 = vmatprep.subr.bf16.mxu0 0
    %227 = vmatpush1.bf16.msra.mxu0 %v217
    %228 = vmatprep.subr.bf16.mxu0 0
    %229 = vmatpush1.bf16.msra.mxu0 %v216
    %230 = vmatprep.subr.bf16.mxu0 0
    %231 = vmatpush1.bf16.msra.mxu0 %v215
    %232 = vmatprep.subr.bf16.mxu0 0
    %233 = vmatpush1.bf16.msra.mxu0 %v214
    %234 = vmatprep.subr.bf16.mxu0 0
    %235 = vmatpush1.bf16.msra.mxu0 %v213
    %236 = vmatprep.subr.bf16.mxu0 0
    %237 = vmatpush1.bf16.msra.mxu0 %v212
    %238 = vmatprep.subr.bf16.mxu0 0
    %239 = vmatpush1.bf16.msra.mxu0 %v211
    %240 = vmatprep.subr.bf16.mxu0 0
    %241 = vmatpush1.bf16.msra.mxu0 %v210
    %242 = vmatprep.subr.bf16.mxu0 0
    %243 = vmatpush2.bf16.msra.mxu0 0
    %244 = vmatprep.subr.bf16.mxu0 0
    %245 = vmatpush2.bf16.msra.mxu0 0
    %246 = vmatprep.subr.bf16.mxu0 0
    %247 = vmatpush2.bf16.msra.mxu0 0
    %248 = vmatprep.subr.bf16.mxu0 0
    %249 = vmatpush2.bf16.msra.mxu0 0
    %250 = vmatprep.subr.bf16.mxu0 0
    %251 = vmatpush2.bf16.msra.mxu0 0
    %252 = vmatprep.subr.bf16.mxu0 0
    %253 = vmatpush2.bf16.msra.mxu0 0
    %254 = vmatprep.subr.bf16.mxu0 0
    %255 = vmatpush2.bf16.msra.mxu0 0
    %256 = vmatprep.subr.bf16.mxu0 0
    %257 = vmatpush2.bf16.msra.mxu0 0
    %258 = vmatprep.mubr.bf16.mxu0 0
    %259 = vmatmul.mubr.bf16.gmra.mxu0 %v154
    %v260 = vpop.f32.mrf.mxu0
    %v261 = vadd.f32 %v176, %v260
    %v262 = vpop.f32.mrf.mxu0
    %v263 = vpop.f32.mrf.mxu0
    %v264 = vpop.f32.mrf.mxu0
    %265 = vdwg.mxu0
    %v266 = vmax.f32 %v261, 0.0
    %v267 = vpack.c.bf16 %v266, %v266
    %v268 = vld [vmem:[#allocation10] sm:$0xf]
    %v269 = vld [vmem:[#allocation10 + $0x4] sm:$0xf]
    %v270 = vld [vmem:[#allocation10 + $0x8] sm:$0xf]
    %v271 = vld [vmem:[#allocation10 + $0xc] sm:$0xf]
    %v272 = vld [vmem:[#allocation10 + $0x10] sm:$0xf]
    %v273 = vld [vmem:[#allocation10 + $0x14] sm:$0xf]
    %v274 = vld [vmem:[#allocation10 + $0x18] sm:$0xf]
    %v275 = vld [vmem:[#allocation10 + $0x1c] sm:$0xf]
    %v276 = vld [vmem:[#allocation10 + $0x20] sm:$0xf]
    %v277 = vld [vmem:[#allocation10 + $0x24] sm:$0xf]
    %v278 = vld [vmem:[#allocation10 + $0x28] sm:$0xf]
    %v279 = vld [vmem:[#allocation10 + $0x2c] sm:$0xf]
    %v280 = vld [vmem:[#allocation10 + $0x30] sm:$0xf]
    %v281 = vld [vmem:[#allocation10 + $0x34] sm:$0xf]
    %v282 = vld [vmem:[#allocation10 + $0x38] sm:$0xf]
    %v283 = vld [vmem:[#allocation10 + $0x3c] sm:$0xf]
    %v284 = vld [vmem:[%s7] sm:$0x1]
    %v286 = vlaneseq
    %v287 = vshrl.u32 %v286, 7
    %v288 = vsub.s32 0, %v287
    %v289 = vrot.slane %v284, %v288
    %v307 = vunpack.c.l.b16 %v268
    %v308 = vunpack.c.l.b16 %v269
    %v309 = vunpack.c.l.b16 %v270
    %v310 = vunpack.c.l.b16 %v271
    %v311 = vunpack.c.l.b16 %v272
    %v312 = vunpack.c.l.b16 %v273
    %v313 = vunpack.c.l.b16 %v274
    %v314 = vunpack.c.l.b16 %v275
    %v315 = vunpack.c.l.b16 %v276
    %v316 = vunpack.c.l.b16 %v277
    %v317 = vunpack.c.l.b16 %v278
    %v318 = vunpack.c.l.b16 %v279
    %v319 = vunpack.c.l.b16 %v280
    %v320 = vunpack.c.l.b16 %v281
    %v321 = vunpack.c.l.b16 %v282
    %v322 = vunpack.c.l.b16 %v283
    %v323 = vpack.c.b16 %v308, %v307
    %v324 = vpack.c.b16 %v310, %v309
    %v325 = vpack.c.b16 %v312, %v311
    %v326 = vpack.c.b16 %v314, %v313
    %v327 = vpack.c.b16 %v316, %v315
    %v328 = vpack.c.b16 %v318, %v317
    %v329 = vpack.c.b16 %v320, %v319
    %v330 = vpack.c.b16 %v322, %v321
    %339 = vmatprep.subr.bf16.mxu0 0
    %340 = vmatpush1.bf16.msra.mxu0 %v330
    %341 = vmatprep.subr.bf16.mxu0 0
    %342 = vmatpush1.bf16.msra.mxu0 %v329
    %343 = vmatprep.subr.bf16.mxu0 0
    %344 = vmatpush1.bf16.msra.mxu0 %v328
    %345 = vmatprep.subr.bf16.mxu0 0
    %346 = vmatpush1.bf16.msra.mxu0 %v327
    %347 = vmatprep.subr.bf16.mxu0 0
    %348 = vmatpush1.bf16.msra.mxu0 %v326
    %349 = vmatprep.subr.bf16.mxu0 0
    %350 = vmatpush1.bf16.msra.mxu0 %v325
    %351 = vmatprep.subr.bf16.mxu0 0
    %352 = vmatpush1.bf16.msra.mxu0 %v324
    %353 = vmatprep.subr.bf16.mxu0 0
    %354 = vmatpush1.bf16.msra.mxu0 %v323
    %355 = vmatprep.subr.bf16.mxu0 0
    %356 = vmatpush2.bf16.msra.mxu0 0
    %357 = vmatprep.subr.bf16.mxu0 0
    %358 = vmatpush2.bf16.msra.mxu0 0
    %359 = vmatprep.subr.bf16.mxu0 0
    %360 = vmatpush2.bf16.msra.mxu0 0
    %361 = vmatprep.subr.bf16.mxu0 0
    %362 = vmatpush2.bf16.msra.mxu0 0
    %363 = vmatprep.subr.bf16.mxu0 0
    %364 = vmatpush2.bf16.msra.mxu0 0
    %365 = vmatprep.subr.bf16.mxu0 0
    %366 = vmatpush2.bf16.msra.mxu0 0
    %367 = vmatprep.subr.bf16.mxu0 0
    %368 = vmatpush2.bf16.msra.mxu0 0
    %369 = vmatprep.subr.bf16.mxu0 0
    %370 = vmatpush2.bf16.msra.mxu0 0
    %371 = vmatprep.mubr.bf16.mxu0 0
    %372 = vmatmul.mubr.bf16.gmra.mxu0 %v267
    %v373 = vpop.f32.mrf.mxu0
    %v374 = vadd.f32 %v289, %v373
    %v375 = vpop.f32.mrf.mxu0
    %v376 = vpop.f32.mrf.mxu0
    %v377 = vpop.f32.mrf.mxu0
    %378 = vdwg.mxu0
    %v379 = vtanh.pop %v374
    %v380 = vstv %s83
    %v381 = vmul.f32 %v380, %v379
    %v382 = vpack.c.bf16 %v381, %v381
    %383 = vst [vmem:[#allocation12] sm:$0xf] %v382
    // Predicated region
    $region46: #{tpu_custom_call.1} parent=1 // pred_check
      _
    $region47: #{tpu_custom_call.1} parent=1 // pred_check_branch
      %385 = sbr.rel (0) target = $region49
    $region48: #{tpu_custom_call.1} parent=1 // pred_region
      %s387 = ssub.s32 64, 64
      %388 = vsyncadd [#allocation6], %s387
      %s390 = sshll.u32 [#allocation12], 4
      %s391 = int_to_ptr.vmem [resolvable:$true] %s390
      %393 = dma.vmem_to_hbm [thread:$0]  %s391, 64, %s8, [#allocation6]
    $region49: #{tpu_custom_call.1} parent=1 // pred_fallthru
      _
    // Predicated region
    $region50: #{tpu_custom_call.1} parent=1 // pred_check
      _
    $region51: #{tpu_custom_call.1} parent=1 // pred_check_branch
      %395 = sbr.rel (0) target = $region53
    $region52: #{tpu_custom_call.1} parent=1 // pred_region
      %396 = dma.done [#allocation6], 64
    $region53: #{tpu_custom_call.1} parent=1 // pred_fallthru
      _
    %397 = vsyncpa [#allocation5], 1
    %398 = vsyncpa [#allocation8], 1
    %399 = vsyncpa [#allocation11], 1
    %400 = vsyncpa [#allocation6], 1

</llo_original>
